<compile_context>
chip_gen: v7x
topology: tpu7x:2x2x1
jax: 0.10.0
libtpu: 0.0.40
codegen_flags: <defaults>
</compile_context>

<pallas_src>
import functools

import jax
import jax.numpy as jnp
import numpy as np
from jax.experimental import pallas as pl
from jax.experimental.pallas import tpu as pltpu

LN_EPS = 1e-5


def _layernorm(x, g, b):
    # One reduction sweep: var = E[x^2] - E[x]^2, clamped against fp32
    # cancellation before rsqrt.
    m = jnp.mean(x, axis=-1, keepdims=True)
    m2 = jnp.mean(x * x, axis=-1, keepdims=True)
    var = jnp.maximum(m2 - m * m, 0.0)
    return (x - m) * jax.lax.rsqrt(var + LN_EPS) * g + b


def _mm_bf16(a, w):
    # bf16 operands, fp32 accumulation on the MXU.
    return jnp.dot(a.astype(jnp.bfloat16), w.astype(jnp.bfloat16),
                   preferred_element_type=jnp.float32)


def _round_up(x, m):
    return -(-x // m) * m


def _classifier_groups(num_items, embedding_dim):
    """Group fields so the fused block-diagonal contraction dim K <= 128.

    Each group gets a 128-lane-padded column range in the logits slab, so all
    stores stay lane-dense and the packed classifier weight is only
    (rows_max, total_cols_padded) instead of (emb_features, total_items).
    """
    num_fields = len(num_items)
    fields_per_group = max(1, 128 // embedding_dim)
    groups, col_start, f = [], 0, 0
    while f < num_fields:
        cnt = min(fields_per_group, num_fields - f)
        raw_cols = int(sum(num_items[f:f + cnt]))
        cols_padded = _round_up(raw_cols, 128)
        groups.append(dict(field_start=f, n_fields=cnt,
                           row_start=f * embedding_dim,
                           rows=cnt * embedding_dim,
                           col_start=col_start,
                           raw_cols=raw_cols,
                           cols_padded=cols_padded))
        col_start += cols_padded
        f += cnt
    rows_max = fields_per_group * embedding_dim
    return groups, col_start, rows_max


def _param_slab_layout(emb_features, embedding_dim, latent_dim, cls_cols_padded):
    """Order, widths and 128-lane-aligned offsets of the packed 1-row slab."""
    entries = [
        ("ln0_g", emb_features), ("ln0_b", emb_features),
        ("b1", latent_dim), ("ln1_g", latent_dim), ("ln1_b", latent_dim),
        ("b_mv", 2 * latent_dim),
        ("ln2_g", latent_dim), ("ln2_b", latent_dim),
        ("b2", embedding_dim), ("ln3_g", embedding_dim), ("ln3_b", embedding_dim),
        ("b3", emb_features), ("cls_b", cls_cols_padded),
    ]
    offsets, off = {}, 0
    for name, w in entries:
        offsets[name] = off
        off += _round_up(w, 128)            # each entry starts 128-lane aligned
    return entries, offsets, off


def _make_kernel(*, emb_features, embedding_dim, latent_dim, lat_width,
                 total_cols_padded, p_off, groups):
    def kernel(x_ref, noise_ref, p_ref, w1_ref, wmv_ref, w2_ref, w3_ref,
               wcls_ref, logits_ref, latent_ref):
        def prm(name, width):
            o = p_off[name]
            return p_ref[:, o:o + width]

        # ---- encoder ----
        x = _layernorm(x_ref[...], prm("ln0_g", emb_features),
                       prm("ln0_b", emb_features))
        h = jnp.maximum(_mm_bf16(x, w1_ref[...]) + prm("b1", latent_dim), 0.0)
        h = _layernorm(h, prm("ln1_g", latent_dim), prm("ln1_b", latent_dim))

        # fused [enc_mean | enc_var] matmul
        mv = _mm_bf16(h, wmv_ref[...]) + prm("b_mv", 2 * latent_dim)
        x_mean = mv[:, :latent_dim]
        x_var = mv[:, latent_dim:]

        # ---- reparameterization (matches torch: exp(x_var), not exp(0.5*x_var)) ----
        code = x_mean + jnp.exp(x_var) * noise_ref[...]

        # single full-width lane-dense store: [code | mean | var | 0-pad]
        lat_parts = [code, mv]
        pad = lat_width - 3 * latent_dim
        if pad:
            lat_parts.append(jnp.zeros((code.shape[0], pad), jnp.float32))
        latent_ref[...] = jnp.concatenate(lat_parts, axis=1)

        # ---- reconstruction ----
        r = _layernorm(code, prm("ln2_g", latent_dim), prm("ln2_b", latent_dim))
        r = jnp.maximum(_mm_bf16(r, w2_ref[...]) + prm("b2", embedding_dim), 0.0)
        r = _layernorm(r, prm("ln3_g", embedding_dim), prm("ln3_b", embedding_dim))
        r = _mm_bf16(r, w3_ref[...]) + prm("b3", emb_features)

        # ---- per-field classifiers: block-diagonal matmuls with K <= 128 ----
        wcls = wcls_ref[...]
        chunks = []
        for g in groups:
            r_g = r[:, g["row_start"]:g["row_start"] + g["rows"]]
            w_g = wcls[0:g["rows"], g["col_start"]:g["col_start"] + g["cols_padded"]]
            chunks.append(_mm_bf16(r_g, w_g))
        logits = jnp.concatenate(chunks, axis=1) + prm("cls_b", total_cols_padded)
        logits_ref[...] = logits.astype(logits_ref.dtype)   # bf16 writeback

    return kernel


def _xavier_normal(key, shape):
    fan_in, fan_out = shape
    std = float(np.sqrt(2.0 / (fan_in + fan_out)))
    return jax.random.normal(key, shape, dtype=jnp.float32) * std


def init_params(key, num_items, embedding_dim, latent_dim):
    num_fields = len(num_items)
    emb_features = embedding_dim * num_fields
    keys = iter(jax.random.split(key, 64))

    params = {}
    params["emb_tables"] = [
        jax.random.normal(next(keys), (n, embedding_dim), dtype=jnp.float32)
        * float(np.sqrt(2.0 / (n + embedding_dim)))
        for n in num_items
    ]
    params["ln0_g"] = jnp.ones((1, emb_features), jnp.float32)
    params["ln0_b"] = jnp.zeros((1, emb_features), jnp.float32)
    params["w1"] = _xavier_normal(next(keys), (emb_features, latent_dim))
    params["b1"] = jnp.zeros((1, latent_dim), jnp.float32)
    params["ln1_g"] = jnp.ones((1, latent_dim), jnp.float32)
    params["ln1_b"] = jnp.zeros((1, latent_dim), jnp.float32)
    params["wm"] = _xavier_normal(next(keys), (latent_dim, latent_dim))
    params["bm"] = jnp.zeros((1, latent_dim), jnp.float32)
    params["wv"] = _xavier_normal(next(keys), (latent_dim, latent_dim))
    params["bv"] = jnp.zeros((1, latent_dim), jnp.float32)
    params["ln2_g"] = jnp.ones((1, latent_dim), jnp.float32)
    params["ln2_b"] = jnp.zeros((1, latent_dim), jnp.float32)
    params["w2"] = _xavier_normal(next(keys), (latent_dim, embedding_dim))
    params["b2"] = jnp.zeros((1, embedding_dim), jnp.float32)
    params["ln3_g"] = jnp.ones((1, embedding_dim), jnp.float32)
    params["ln3_b"] = jnp.zeros((1, embedding_dim), jnp.float32)
    params["w3"] = _xavier_normal(next(keys), (embedding_dim, emb_features))
    params["b3"] = jnp.zeros((1, emb_features), jnp.float32)
    params["cls_w"] = [
        _xavier_normal(next(keys), (embedding_dim, n)) for n in num_items
    ]
    params["cls_b"] = [jnp.zeros((1, n), jnp.float32) for n in num_items]
    return params


def pack_kernel_params(params, *, num_items, embedding_dim, latent_dim):
    """One-time (outside jit) packing of weights into kernel-ready layouts."""
    num_fields = len(num_items)
    emb_features = embedding_dim * num_fields
    groups, total_cols_padded, rows_max = _classifier_groups(num_items,
                                                             embedding_dim)

    # grouped block-diagonal classifier weight + 128-aligned padded bias
    wcls = jnp.zeros((rows_max, total_cols_padded), jnp.float32)
    bcls = jnp.zeros((1, total_cols_padded), jnp.float32)
    for g in groups:
        col = g["col_start"]
        for j in range(g["n_fields"]):
            fi = g["field_start"] + j
            n = int(num_items[fi])
            wcls = wcls.at[j * embedding_dim:(j + 1) * embedding_dim,
                           col:col + n].set(params["cls_w"][fi])
            bcls = bcls.at[:, col:col + n].set(params["cls_b"][fi])
            col += n

    entries, _, _ = _param_slab_layout(emb_features, embedding_dim, latent_dim,
                                       total_cols_padded)
    rows = {
        "ln0_g": params["ln0_g"], "ln0_b": params["ln0_b"],
        "b1": params["b1"], "ln1_g": params["ln1_g"], "ln1_b": params["ln1_b"],
        "b_mv": jnp.concatenate([params["bm"], params["bv"]], axis=1),
        "ln2_g": params["ln2_g"], "ln2_b": params["ln2_b"],
        "b2": params["b2"], "ln3_g": params["ln3_g"], "ln3_b": params["ln3_b"],
        "b3": params["b3"], "cls_b": bcls,
    }
    chunks = []
    for name, w in entries:
        v = rows[name]
        pad = (-w) % 128
        if pad:
            v = jnp.pad(v, ((0, 0), (0, pad)))
        chunks.append(v)
    pslab = jnp.concatenate(chunks, axis=1)            # (1, P), P % 128 == 0

    return {
        "pslab": pslab,
        "w1": params["w1"].astype(jnp.bfloat16),
        "wmv": jnp.concatenate([params["wm"], params["wv"]],
                               axis=1).astype(jnp.bfloat16),
        "w2": params["w2"].astype(jnp.bfloat16),
        "w3": params["w3"].astype(jnp.bfloat16),
        "wcls": wcls.astype(jnp.bfloat16),
    }


@functools.partial(jax.jit, static_argnames=("num_items", "embedding_dim",
                                             "latent_dim"))
def mlp_vae_forward(x_idx, noise, emb_tables, kparams, *, num_items,
                    embedding_dim, latent_dim):
    """x_idx: int32[B, num_fields]. Returns (list_of_logits, (code, mean, var))."""
    num_fields = len(num_items)
    B = x_idx.shape[0]
    emb_features = embedding_dim * num_fields
    groups, total_cols_padded, _ = _classifier_groups(num_items, embedding_dim)
    lat_width = _round_up(3 * latent_dim, 128)
    _, p_off, _ = _param_slab_layout(emb_features, embedding_dim, latent_dim,
                                     total_cols_padded)

    # Embedding gather (indexing glue) + feature concat.
    # TODO(synk): at production batch, move the gather into the kernel
    # (scalar-prefetched indices + DMA row gather) so x_emb never round-trips HBM.
    x_emb = jnp.concatenate(
        [jnp.take(emb_tables[i], x_idx[:, i], axis=0)
         for i in range(num_fields)], axis=1)

    # ---- VMEM-aware batch-tile selection (48 MiB budget fits v7x's 64 MiB) ----
    weight_bytes = sum(
        int(np.prod(kparams[k].shape)) * kparams[k].dtype.itemsize
        for k in ("pslab", "w1", "wmv", "w2", "w3", "wcls"))

    def tile_bytes(tb):
        act = tb * (emb_features + latent_dim) * 4               # fp32 inputs
        out = tb * total_cols_padded * 2 + tb * lat_width * 4    # bf16 + fp32
        return 2 * (act + out)                                   # double-buffered

    TB = None
    for cand in (512, 256, 128):
        if B >= cand and weight_bytes + tile_bytes(cand) <= (48 << 20):
            TB = cand
            break
    if TB is None:
        TB = 128 if B >= 128 else _round_up(B, 8)
    B_pad = _round_up(B, TB)
    if B_pad != B:
        x_emb = jnp.pad(x_emb, ((0, B_pad - B), (0, 0)))
        noise = jnp.pad(noise, ((0, B_pad - B), (0, 0)))
    grid = (B_pad // TB,)

    vmem_limit = int(min(max(2 * (weight_bytes + tile_bytes(TB)) + (4 << 20),
                             16 << 20), 100 << 20))

    kernel = _make_kernel(emb_features=emb_features, embedding_dim=embedding_dim,
                          latent_dim=latent_dim, lat_width=lat_width,
                          total_cols_padded=total_cols_padded, p_off=p_off,
                          groups=groups)

    def const_spec(a):
        # Grid-invariant operand: constant index_map, single-buffered.
        return pl.BlockSpec(a.shape, lambda i: (0, 0),
                            pipeline_mode=pl.Buffered(buffer_count=1))

    # TODO(synk): for very large total vocabularies add a classifier-column
    # grid axis (tile 2048-4096 lanes) so the logits block stays inside v7x's
    # 64 MiB VMEM instead of shrinking TB.
    logits_slab, latent_slab = pl.pallas_call(
        kernel,
        out_shape=(jax.ShapeDtypeStruct((B_pad, total_cols_padded), jnp.bfloat16),
                   jax.ShapeDtypeStruct((B_pad, lat_width), jnp.float32)),
        grid=grid,
        in_specs=[
            pl.BlockSpec((TB, emb_features), lambda i: (i, 0)),   # x_emb
            pl.BlockSpec((TB, latent_dim), lambda i: (i, 0)),     # noise
            const_spec(kparams["pslab"]), const_spec(kparams["w1"]),
            const_spec(kparams["wmv"]), const_spec(kparams["w2"]),
            const_spec(kparams["w3"]), const_spec(kparams["wcls"]),
        ],
        out_specs=(pl.BlockSpec((TB, total_cols_padded), lambda i: (i, 0)),
                   pl.BlockSpec((TB, lat_width), lambda i: (i, 0))),
        compiler_params=pltpu.CompilerParams(
            dimension_semantics=("parallel",),
            vmem_limit_bytes=vmem_limit),
    )(x_emb, noise, kparams["pslab"], kparams["w1"], kparams["wmv"],
      kparams["w2"], kparams["w3"], kparams["wcls"])

    # Per-field slices out of the padded bf16 logits slab.
    field_cols = []
    for g in groups:
        off = g["col_start"]
        for j in range(g["n_fields"]):
            field_cols.append(off)
            off += int(num_items[g["field_start"] + j])
    logits = [logits_slab[:B, c:c + int(n)]
              for c, n in zip(field_cols, num_items)]
    code = latent_slab[:B, :latent_dim]
    x_mean = latent_slab[:B, latent_dim:2 * latent_dim]
    x_var = latent_slab[:B, 2 * latent_dim:3 * latent_dim]
    return logits, (code, x_mean, x_var)


def _reference_forward(x_idx, noise, params, num_items, embedding_dim,
                       latent_dim):
    """Pure-JAX reference (same bf16 matmul-operand convention as the kernel)."""
    num_fields = len(num_items)
    x = jnp.concatenate(
        [jnp.take(params["emb_tables"][i], x_idx[:, i], axis=0)
         for i in range(num_fields)], axis=1)
    x = _layernorm(x, params["ln0_g"], params["ln0_b"])
    h = jnp.maximum(_mm_bf16(x, params["w1"]) + params["b1"], 0.0)
    h = _layernorm(h, params["ln1_g"], params["ln1_b"])
    x_mean = _mm_bf16(h, params["wm"]) + params["bm"]
    x_var = _mm_bf16(h, params["wv"]) + params["bv"]
    code = x_mean + jnp.exp(x_var) * noise
    r = _layernorm(code, params["ln2_g"], params["ln2_b"])
    r = jnp.maximum(_mm_bf16(r, params["w2"]) + params["b2"], 0.0)
    r = _layernorm(r, params["ln3_g"], params["ln3_b"])
    r = _mm_bf16(r, params["w3"]) + params["b3"]
    logits = [
        _mm_bf16(r[:, i * embedding_dim:(i + 1) * embedding_dim],
                 params["cls_w"][i]) + params["cls_b"][i]
        for i in range(num_fields)
    ]
    return logits, (code, x_mean, x_var)


if __name__ == "__main__":
    # Small, deterministic configuration (5 fields -> exercises the multi-group
    # classifier path: group0 = fields 0..3, group1 = field 4).
    num_items = (24, 16, 32, 12, 20)   # vocab size per categorical field
    embedding_dim = 32
    latent_dim = 32
    batch = 8

    key = jax.random.PRNGKey(0)
    k_params, k_idx, k_noise = jax.random.split(key, 3)

    params = init_params(k_params, num_items, embedding_dim, latent_dim)
    kparams = pack_kernel_params(params, num_items=num_items,
                                 embedding_dim=embedding_dim,
                                 latent_dim=latent_dim)

    # Integer feature indices x[B, num_fields].
    x_idx = jnp.stack(
        [jax.random.randint(jax.random.fold_in(k_idx, i), (batch,), 0, n)
         for i, n in enumerate(num_items)], axis=1).astype(jnp.int32)

    # Deterministic reparameterization noise (replaces torch.randn).
    noise = jax.random.normal(k_noise, (batch, latent_dim), dtype=jnp.float32)

    logits, (code, x_mean, x_var) = mlp_vae_forward(
        x_idx, noise, params["emb_tables"], kparams,
        num_items=num_items, embedding_dim=embedding_dim,
        latent_dim=latent_dim)
    jax.block_until_ready((logits, code, x_mean, x_var))

    # Cross-check against a pure-JAX reference (tolerances sized for bf16
    # matmul operands / bf16 logits writeback with fp32 accumulation).
    ref_logits, (ref_code, ref_mean, ref_var) = _reference_forward(
        x_idx, noise, params, num_items, embedding_dim, latent_dim)
    for a, b in zip(logits, ref_logits):
        np.testing.assert_allclose(np.asarray(a, dtype=np.float32),
                                   np.asarray(b), rtol=2e-2, atol=2e-2)
    np.testing.assert_allclose(np.asarray(code), np.asarray(ref_code),
                               rtol=1e-2, atol=1e-2)
    np.testing.assert_allclose(np.asarray(x_mean), np.asarray(ref_mean),
                               rtol=1e-2, atol=1e-2)
    np.testing.assert_allclose(np.asarray(x_var), np.asarray(ref_var),
                               rtol=1e-2, atol=1e-2)

    print("KERNEL_OK")
</pallas_src>

<mosaic_0001>
module attributes {stable_mosaic.version = 11 : i64} {
  func.func @kernel(%arg0: i32, %arg1: memref<8x160xf32, #tpu.memory_space<vmem>>, %arg2: memref<8x32xf32, #tpu.memory_space<vmem>>, %arg3: memref<1x2176xf32, #tpu.memory_space<vmem>>, %arg4: memref<160x32xbf16, #tpu.memory_space<vmem>>, %arg5: memref<32x64xbf16, #tpu.memory_space<vmem>>, %arg6: memref<32x32xbf16, #tpu.memory_space<vmem>>, %arg7: memref<32x160xbf16, #tpu.memory_space<vmem>>, %arg8: memref<128x256xbf16, #tpu.memory_space<vmem>>, %arg9: memref<8x256xbf16, #tpu.memory_space<vmem>>, %arg10: memref<8x128xf32, #tpu.memory_space<vmem>>) attributes {dimension_semantics = [#tpu.dimension_semantics<parallel>], iteration_bounds = array<i64: 1>, scalar_prefetch = 0 : i64, scratch_operands = 0 : i64, tpu.core_type = #tpu.core_type<tc>, window_params = [{transform_indices = @transform_0, window_bounds = array<i64: 8, 160>}, {transform_indices = @transform_1, window_bounds = array<i64: 8, 32>}, {pipeline_mode = #tpu.pipeline_mode<synchronous>, transform_indices = @transform_2, window_bounds = array<i64: 1, 2176>}, {pipeline_mode = #tpu.pipeline_mode<synchronous>, transform_indices = @transform_3, window_bounds = array<i64: 160, 32>}, {pipeline_mode = #tpu.pipeline_mode<synchronous>, transform_indices = @transform_4, window_bounds = array<i64: 32, 64>}, {pipeline_mode = #tpu.pipeline_mode<synchronous>, transform_indices = @transform_5, window_bounds = array<i64: 32, 32>}, {pipeline_mode = #tpu.pipeline_mode<synchronous>, transform_indices = @transform_6, window_bounds = array<i64: 32, 160>}, {pipeline_mode = #tpu.pipeline_mode<synchronous>, transform_indices = @transform_7, window_bounds = array<i64: 128, 256>}, {transform_indices = @transform_8, window_bounds = array<i64: 8, 256>}, {transform_indices = @transform_9, window_bounds = array<i64: 8, 128>}]} {
    %c0 = arith.constant 0 : index
    %c0_0 = arith.constant 0 : index
    %0 = vector.load %arg1[%c0, %c0_0] : memref<8x160xf32, #tpu.memory_space<vmem>>, vector<8x160xf32>
    %c0_1 = arith.constant 0 : index
    %c0_2 = arith.constant 0 : index
    %1 = vector.load %arg3[%c0_1, %c0_2] : memref<1x2176xf32, #tpu.memory_space<vmem>>, vector<1x160xf32>
    %c0_3 = arith.constant 0 : index
    %c256 = arith.constant 256 : index
    %2 = vector.load %arg3[%c0_3, %c256] : memref<1x2176xf32, #tpu.memory_space<vmem>>, vector<1x160xf32>
    %cst = arith.constant dense<0.000000e+00> : vector<8xf32>
    %3 = vector.multi_reduction <add>, %0, %cst [1] : vector<8x160xf32> to vector<8xf32>
    %4 = vector.shape_cast %3 : vector<8xf32> to vector<8x1xf32>
    %cst_4 = arith.constant 1.600000e+02 : f32
    %5 = vector.broadcast %cst_4 : f32 to vector<8x1xf32>
    %6 = arith.divf %4, %5 : vector<8x1xf32>
    %7 = arith.mulf %0, %0 : vector<8x160xf32>
    %cst_5 = arith.constant dense<0.000000e+00> : vector<8xf32>
    %8 = vector.multi_reduction <add>, %7, %cst_5 [1] : vector<8x160xf32> to vector<8xf32>
    %9 = vector.shape_cast %8 : vector<8xf32> to vector<8x1xf32>
    %cst_6 = arith.constant 1.600000e+02 : f32
    %10 = vector.broadcast %cst_6 : f32 to vector<8x1xf32>
    %11 = arith.divf %9, %10 : vector<8x1xf32>
    %12 = arith.mulf %6, %6 : vector<8x1xf32>
    %13 = arith.subf %11, %12 : vector<8x1xf32>
    %cst_7 = arith.constant 0.000000e+00 : f32
    %14 = vector.broadcast %cst_7 : f32 to vector<8x1xf32>
    %15 = arith.maximumf %13, %14 : vector<8x1xf32>
    %16 = vector.broadcast %6 : vector<8x1xf32> to vector<8x160xf32>
    %17 = arith.subf %0, %16 : vector<8x160xf32>
    %cst_8 = arith.constant 9.99999974E-6 : f32
    %18 = vector.broadcast %cst_8 : f32 to vector<8x1xf32>
    %19 = arith.addf %15, %18 : vector<8x1xf32>
    %20 = math.rsqrt %19 : vector<8x1xf32>
    %21 = vector.broadcast %20 : vector<8x1xf32> to vector<8x160xf32>
    %22 = arith.mulf %17, %21 : vector<8x160xf32>
    %23 = vector.broadcast %1 : vector<1x160xf32> to vector<8x160xf32>
    %24 = arith.mulf %22, %23 : vector<8x160xf32>
    %25 = vector.broadcast %2 : vector<1x160xf32> to vector<8x160xf32>
    %26 = arith.addf %24, %25 : vector<8x160xf32>
    %c0_9 = arith.constant 0 : index
    %c0_10 = arith.constant 0 : index
    %27 = vector.load %arg4[%c0_9, %c0_10] : memref<160x32xbf16, #tpu.memory_space<vmem>>, vector<160x32xbf16>
    %28 = arith.truncf %26 : vector<8x160xf32> to vector<8x160xbf16>
    %cst_11 = arith.constant dense<0.000000e+00> : vector<8x32xf32>
    %29 = tpu.matmul %28, %27, %cst_11 {dimension_numbers = #tpu.dot_dimension_numbers<[1], [0], [0], [1], [0, 0, 1, 1], [], []>} : vector<8x160xbf16>, vector<160x32xbf16>, vector<8x32xf32> -> vector<8x32xf32>
    %c0_12 = arith.constant 0 : index
    %c512 = arith.constant 512 : index
    %30 = vector.load %arg3[%c0_12, %c512] : memref<1x2176xf32, #tpu.memory_space<vmem>>, vector<1x32xf32>
    %31 = vector.broadcast %30 : vector<1x32xf32> to vector<8x32xf32>
    %32 = arith.addf %29, %31 : vector<8x32xf32>
    %cst_13 = arith.constant 0.000000e+00 : f32
    %33 = vector.broadcast %cst_13 : f32 to vector<8x32xf32>
    %34 = arith.maximumf %32, %33 : vector<8x32xf32>
    %c0_14 = arith.constant 0 : index
    %c640 = arith.constant 640 : index
    %35 = vector.load %arg3[%c0_14, %c640] : memref<1x2176xf32, #tpu.memory_space<vmem>>, vector<1x32xf32>
    %c0_15 = arith.constant 0 : index
    %c768 = arith.constant 768 : index
    %36 = vector.load %arg3[%c0_15, %c768] : memref<1x2176xf32, #tpu.memory_space<vmem>>, vector<1x32xf32>
    %cst_16 = arith.constant dense<0.000000e+00> : vector<8xf32>
    %37 = vector.multi_reduction <add>, %34, %cst_16 [1] : vector<8x32xf32> to vector<8xf32>
    %38 = vector.shape_cast %37 : vector<8xf32> to vector<8x1xf32>
    %cst_17 = arith.constant 3.200000e+01 : f32
    %39 = vector.broadcast %cst_17 : f32 to vector<8x1xf32>
    %40 = arith.divf %38, %39 : vector<8x1xf32>
    %41 = arith.mulf %34, %34 : vector<8x32xf32>
    %cst_18 = arith.constant dense<0.000000e+00> : vector<8xf32>
    %42 = vector.multi_reduction <add>, %41, %cst_18 [1] : vector<8x32xf32> to vector<8xf32>
    %43 = vector.shape_cast %42 : vector<8xf32> to vector<8x1xf32>
    %cst_19 = arith.constant 3.200000e+01 : f32
    %44 = vector.broadcast %cst_19 : f32 to vector<8x1xf32>
    %45 = arith.divf %43, %44 : vector<8x1xf32>
    %46 = arith.mulf %40, %40 : vector<8x1xf32>
    %47 = arith.subf %45, %46 : vector<8x1xf32>
    %cst_20 = arith.constant 0.000000e+00 : f32
    %48 = vector.broadcast %cst_20 : f32 to vector<8x1xf32>
    %49 = arith.maximumf %47, %48 : vector<8x1xf32>
    %50 = vector.broadcast %40 : vector<8x1xf32> to vector<8x32xf32>
    %51 = arith.subf %34, %50 : vector<8x32xf32>
    %cst_21 = arith.constant 9.99999974E-6 : f32
    %52 = vector.broadcast %cst_21 : f32 to vector<8x1xf32>
    %53 = arith.addf %49, %52 : vector<8x1xf32>
    %54 = math.rsqrt %53 : vector<8x1xf32>
    %55 = vector.broadcast %54 : vector<8x1xf32> to vector<8x32xf32>
    %56 = arith.mulf %51, %55 : vector<8x32xf32>
    %57 = vector.broadcast %35 : vector<1x32xf32> to vector<8x32xf32>
    %58 = arith.mulf %56, %57 : vector<8x32xf32>
    %59 = vector.broadcast %36 : vector<1x32xf32> to vector<8x32xf32>
    %60 = arith.addf %58, %59 : vector<8x32xf32>
    %c0_22 = arith.constant 0 : index
    %c0_23 = arith.constant 0 : index
    %61 = vector.load %arg5[%c0_22, %c0_23] : memref<32x64xbf16, #tpu.memory_space<vmem>>, vector<32x64xbf16>
    %62 = arith.truncf %60 : vector<8x32xf32> to vector<8x32xbf16>
    %cst_24 = arith.constant dense<0.000000e+00> : vector<8x64xf32>
    %63 = tpu.matmul %62, %61, %cst_24 {dimension_numbers = #tpu.dot_dimension_numbers<[1], [0], [0], [1], [0, 0, 1, 1], [], []>} : vector<8x32xbf16>, vector<32x64xbf16>, vector<8x64xf32> -> vector<8x64xf32>
    %c0_25 = arith.constant 0 : index
    %c896 = arith.constant 896 : index
    %64 = vector.load %arg3[%c0_25, %c896] : memref<1x2176xf32, #tpu.memory_space<vmem>>, vector<1x64xf32>
    %65 = vector.broadcast %64 : vector<1x64xf32> to vector<8x64xf32>
    %66 = arith.addf %63, %65 : vector<8x64xf32>
    %67 = vector.extract_strided_slice %66 {offsets = [0, 0], sizes = [8, 32], strides = [1, 1]} : vector<8x64xf32> to vector<8x32xf32>
    %68 = vector.extract_strided_slice %66 {offsets = [0, 32], sizes = [8, 32], strides = [1, 1]} : vector<8x64xf32> to vector<8x32xf32>
    %69 = math.exp %68 : vector<8x32xf32>
    %c0_26 = arith.constant 0 : index
    %c0_27 = arith.constant 0 : index
    %70 = vector.load %arg2[%c0_26, %c0_27] : memref<8x32xf32, #tpu.memory_space<vmem>>, vector<8x32xf32>
    %71 = arith.mulf %69, %70 : vector<8x32xf32>
    %72 = arith.addf %67, %71 : vector<8x32xf32>
    %cst_28 = arith.constant 0.000000e+00 : f32
    %73 = vector.broadcast %cst_28 : f32 to vector<8x32xf32>
    %74 = tpu.concatenate %72, %66, %73 in 1 : vector<8x32xf32>, vector<8x64xf32>, vector<8x32xf32> -> vector<8x128xf32>
    %c0_29 = arith.constant 0 : index
    %c0_30 = arith.constant 0 : index
    %75 = vector.load %arg10[%c0_29, %c0_30] : memref<8x128xf32, #tpu.memory_space<vmem>>, vector<8x128xf32>
    tpu.vector_store %arg10[%c0_29, %c0_30], %74 {strides = array<i32>} : memref<8x128xf32, #tpu.memory_space<vmem>>, vector<8x128xf32>,
    %c0_31 = arith.constant 0 : index
    %c1024 = arith.constant 1024 : index
    %76 = vector.load %arg3[%c0_31, %c1024] : memref<1x2176xf32, #tpu.memory_space<vmem>>, vector<1x32xf32>
    %c0_32 = arith.constant 0 : index
    %c1152 = arith.constant 1152 : index
    %77 = vector.load %arg3[%c0_32, %c1152] : memref<1x2176xf32, #tpu.memory_space<vmem>>, vector<1x32xf32>
    %cst_33 = arith.constant dense<0.000000e+00> : vector<8xf32>
    %78 = vector.multi_reduction <add>, %72, %cst_33 [1] : vector<8x32xf32> to vector<8xf32>
    %79 = vector.shape_cast %78 : vector<8xf32> to vector<8x1xf32>
    %cst_34 = arith.constant 3.200000e+01 : f32
    %80 = vector.broadcast %cst_34 : f32 to vector<8x1xf32>
    %81 = arith.divf %79, %80 : vector<8x1xf32>
    %82 = arith.mulf %72, %72 : vector<8x32xf32>
    %cst_35 = arith.constant dense<0.000000e+00> : vector<8xf32>
    %83 = vector.multi_reduction <add>, %82, %cst_35 [1] : vector<8x32xf32> to vector<8xf32>
    %84 = vector.shape_cast %83 : vector<8xf32> to vector<8x1xf32>
    %cst_36 = arith.constant 3.200000e+01 : f32
    %85 = vector.broadcast %cst_36 : f32 to vector<8x1xf32>
    %86 = arith.divf %84, %85 : vector<8x1xf32>
    %87 = arith.mulf %81, %81 : vector<8x1xf32>
    %88 = arith.subf %86, %87 : vector<8x1xf32>
    %cst_37 = arith.constant 0.000000e+00 : f32
    %89 = vector.broadcast %cst_37 : f32 to vector<8x1xf32>
    %90 = arith.maximumf %88, %89 : vector<8x1xf32>
    %91 = vector.broadcast %81 : vector<8x1xf32> to vector<8x32xf32>
    %92 = arith.subf %72, %91 : vector<8x32xf32>
    %cst_38 = arith.constant 9.99999974E-6 : f32
    %93 = vector.broadcast %cst_38 : f32 to vector<8x1xf32>
    %94 = arith.addf %90, %93 : vector<8x1xf32>
    %95 = math.rsqrt %94 : vector<8x1xf32>
    %96 = vector.broadcast %95 : vector<8x1xf32> to vector<8x32xf32>
    %97 = arith.mulf %92, %96 : vector<8x32xf32>
    %98 = vector.broadcast %76 : vector<1x32xf32> to vector<8x32xf32>
    %99 = arith.mulf %97, %98 : vector<8x32xf32>
    %100 = vector.broadcast %77 : vector<1x32xf32> to vector<8x32xf32>
    %101 = arith.addf %99, %100 : vector<8x32xf32>
    %c0_39 = arith.constant 0 : index
    %c0_40 = arith.constant 0 : index
    %102 = vector.load %arg6[%c0_39, %c0_40] : memref<32x32xbf16, #tpu.memory_space<vmem>>, vector<32x32xbf16>
    %103 = arith.truncf %101 : vector<8x32xf32> to vector<8x32xbf16>
    %cst_41 = arith.constant dense<0.000000e+00> : vector<8x32xf32>
    %104 = tpu.matmul %103, %102, %cst_41 {dimension_numbers = #tpu.dot_dimension_numbers<[1], [0], [0], [1], [0, 0, 1, 1], [], []>} : vector<8x32xbf16>, vector<32x32xbf16>, vector<8x32xf32> -> vector<8x32xf32>
    %c0_42 = arith.constant 0 : index
    %c1280 = arith.constant 1280 : index
    %105 = vector.load %arg3[%c0_42, %c1280] : memref<1x2176xf32, #tpu.memory_space<vmem>>, vector<1x32xf32>
    %106 = vector.broadcast %105 : vector<1x32xf32> to vector<8x32xf32>
    %107 = arith.addf %104, %106 : vector<8x32xf32>
    %cst_43 = arith.constant 0.000000e+00 : f32
    %108 = vector.broadcast %cst_43 : f32 to vector<8x32xf32>
    %109 = arith.maximumf %107, %108 : vector<8x32xf32>
    %c0_44 = arith.constant 0 : index
    %c1408 = arith.constant 1408 : index
    %110 = vector.load %arg3[%c0_44, %c1408] : memref<1x2176xf32, #tpu.memory_space<vmem>>, vector<1x32xf32>
    %c0_45 = arith.constant 0 : index
    %c1536 = arith.constant 1536 : index
    %111 = vector.load %arg3[%c0_45, %c1536] : memref<1x2176xf32, #tpu.memory_space<vmem>>, vector<1x32xf32>
    %cst_46 = arith.constant dense<0.000000e+00> : vector<8xf32>
    %112 = vector.multi_reduction <add>, %109, %cst_46 [1] : vector<8x32xf32> to vector<8xf32>
    %113 = vector.shape_cast %112 : vector<8xf32> to vector<8x1xf32>
    %cst_47 = arith.constant 3.200000e+01 : f32
    %114 = vector.broadcast %cst_47 : f32 to vector<8x1xf32>
    %115 = arith.divf %113, %114 : vector<8x1xf32>
    %116 = arith.mulf %109, %109 : vector<8x32xf32>
    %cst_48 = arith.constant dense<0.000000e+00> : vector<8xf32>
    %117 = vector.multi_reduction <add>, %116, %cst_48 [1] : vector<8x32xf32> to vector<8xf32>
    %118 = vector.shape_cast %117 : vector<8xf32> to vector<8x1xf32>
    %cst_49 = arith.constant 3.200000e+01 : f32
    %119 = vector.broadcast %cst_49 : f32 to vector<8x1xf32>
    %120 = arith.divf %118, %119 : vector<8x1xf32>
    %121 = arith.mulf %115, %115 : vector<8x1xf32>
    %122 = arith.subf %120, %121 : vector<8x1xf32>
    %cst_50 = arith.constant 0.000000e+00 : f32
    %123 = vector.broadcast %cst_50 : f32 to vector<8x1xf32>
    %124 = arith.maximumf %122, %123 : vector<8x1xf32>
    %125 = vector.broadcast %115 : vector<8x1xf32> to vector<8x32xf32>
    %126 = arith.subf %109, %125 : vector<8x32xf32>
    %cst_51 = arith.constant 9.99999974E-6 : f32
    %127 = vector.broadcast %cst_51 : f32 to vector<8x1xf32>
    %128 = arith.addf %124, %127 : vector<8x1xf32>
    %129 = math.rsqrt %128 : vector<8x1xf32>
    %130 = vector.broadcast %129 : vector<8x1xf32> to vector<8x32xf32>
    %131 = arith.mulf %126, %130 : vector<8x32xf32>
    %132 = vector.broadcast %110 : vector<1x32xf32> to vector<8x32xf32>
    %133 = arith.mulf %131, %132 : vector<8x32xf32>
    %134 = vector.broadcast %111 : vector<1x32xf32> to vector<8x32xf32>
    %135 = arith.addf %133, %134 : vector<8x32xf32>
    %c0_52 = arith.constant 0 : index
    %c0_53 = arith.constant 0 : index
    %136 = vector.load %arg7[%c0_52, %c0_53] : memref<32x160xbf16, #tpu.memory_space<vmem>>, vector<32x160xbf16>
    %137 = arith.truncf %135 : vector<8x32xf32> to vector<8x32xbf16>
    %cst_54 = arith.constant dense<0.000000e+00> : vector<8x160xf32>
    %138 = tpu.matmul %137, %136, %cst_54 {dimension_numbers = #tpu.dot_dimension_numbers<[1], [0], [0], [1], [0, 0, 1, 1], [], []>} : vector<8x32xbf16>, vector<32x160xbf16>, vector<8x160xf32> -> vector<8x160xf32>
    %c0_55 = arith.constant 0 : index
    %c1664 = arith.constant 1664 : index
    %139 = vector.load %arg3[%c0_55, %c1664] : memref<1x2176xf32, #tpu.memory_space<vmem>>, vector<1x160xf32>
    %140 = vector.broadcast %139 : vector<1x160xf32> to vector<8x160xf32>
    %141 = arith.addf %138, %140 : vector<8x160xf32>
    %c0_56 = arith.constant 0 : index
    %c0_57 = arith.constant 0 : index
    %142 = vector.load %arg8[%c0_56, %c0_57] : memref<128x256xbf16, #tpu.memory_space<vmem>>, vector<128x256xbf16>
    %143 = vector.extract_strided_slice %141 {offsets = [0, 0], sizes = [8, 128], strides = [1, 1]} : vector<8x160xf32> to vector<8x128xf32>
    %144 = vector.extract_strided_slice %142 {offsets = [0, 0], sizes = [128, 128], strides = [1, 1]} : vector<128x256xbf16> to vector<128x128xbf16>
    %145 = arith.truncf %143 : vector<8x128xf32> to vector<8x128xbf16>
    %cst_58 = arith.constant dense<0.000000e+00> : vector<8x128xf32>
    %146 = tpu.matmul %145, %144, %cst_58 {dimension_numbers = #tpu.dot_dimension_numbers<[1], [0], [0], [1], [0, 0, 1, 1], [], []>} : vector<8x128xbf16>, vector<128x128xbf16>, vector<8x128xf32> -> vector<8x128xf32>
    %147 = vector.extract_strided_slice %141 {offsets = [0, 128], sizes = [8, 32], strides = [1, 1]} : vector<8x160xf32> to vector<8x32xf32>
    %148 = vector.extract_strided_slice %142 {offsets = [0, 128], sizes = [32, 128], strides = [1, 1]} : vector<128x256xbf16> to vector<32x128xbf16>
    %149 = arith.truncf %147 : vector<8x32xf32> to vector<8x32xbf16>
    %cst_59 = arith.constant dense<0.000000e+00> : vector<8x128xf32>
    %150 = tpu.matmul %149, %148, %cst_59 {dimension_numbers = #tpu.dot_dimension_numbers<[1], [0], [0], [1], [0, 0, 1, 1], [], []>} : vector<8x32xbf16>, vector<32x128xbf16>, vector<8x128xf32> -> vector<8x128xf32>
    %151 = tpu.concatenate %146, %150 in 1 : vector<8x128xf32>, vector<8x128xf32> -> vector<8x256xf32>
    %c0_60 = arith.constant 0 : index
    %c1920 = arith.constant 1920 : index
    %152 = vector.load %arg3[%c0_60, %c1920] : memref<1x2176xf32, #tpu.memory_space<vmem>>, vector<1x256xf32>
    %153 = vector.broadcast %152 : vector<1x256xf32> to vector<8x256xf32>
    %154 = arith.addf %151, %153 : vector<8x256xf32>
    %155 = arith.truncf %154 : vector<8x256xf32> to vector<8x256xbf16>
    %c0_61 = arith.constant 0 : index
    %c0_62 = arith.constant 0 : index
    %156 = vector.load %arg9[%c0_61, %c0_62] : memref<8x256xbf16, #tpu.memory_space<vmem>>, vector<8x256xbf16>
    tpu.vector_store %arg9[%c0_61, %c0_62], %155 {strides = array<i32>} : memref<8x256xbf16, #tpu.memory_space<vmem>>, vector<8x256xbf16>,
    return
  }
  func.func @transform_0(%arg0: i32) -> (i32, i32) {
    %c0_i32 = arith.constant 0 : i32
    %c0_i32_0 = arith.constant 0 : i32
    return %arg0, %c0_i32 : i32, i32
  }
  func.func @transform_1(%arg0: i32) -> (i32, i32) {
    %c0_i32 = arith.constant 0 : i32
    %c0_i32_0 = arith.constant 0 : i32
    return %arg0, %c0_i32 : i32, i32
  }
  func.func @transform_2(%arg0: i32) -> (i32, i32) {
    %c0_i32 = arith.constant 0 : i32
    %c0_i32_0 = arith.constant 0 : i32
    %c0_i32_1 = arith.constant 0 : i32
    return %c0_i32, %c0_i32_0 : i32, i32
  }
  func.func @transform_3(%arg0: i32) -> (i32, i32) {
    %c0_i32 = arith.constant 0 : i32
    %c0_i32_0 = arith.constant 0 : i32
    %c0_i32_1 = arith.constant 0 : i32
    return %c0_i32, %c0_i32_0 : i32, i32
  }
  func.func @transform_4(%arg0: i32) -> (i32, i32) {
    %c0_i32 = arith.constant 0 : i32
    %c0_i32_0 = arith.constant 0 : i32
    %c0_i32_1 = arith.constant 0 : i32
    return %c0_i32, %c0_i32_0 : i32, i32
  }
  func.func @transform_5(%arg0: i32) -> (i32, i32) {
    %c0_i32 = arith.constant 0 : i32
    %c0_i32_0 = arith.constant 0 : i32
    %c0_i32_1 = arith.constant 0 : i32
    return %c0_i32, %c0_i32_0 : i32, i32
  }
  func.func @transform_6(%arg0: i32) -> (i32, i32) {
    %c0_i32 = arith.constant 0 : i32
    %c0_i32_0 = arith.constant 0 : i32
    %c0_i32_1 = arith.constant 0 : i32
    return %c0_i32, %c0_i32_0 : i32, i32
  }
  func.func @transform_7(%arg0: i32) -> (i32, i32) {
    %c0_i32 = arith.constant 0 : i32
    %c0_i32_0 = arith.constant 0 : i32
    %c0_i32_1 = arith.constant 0 : i32
    return %c0_i32, %c0_i32_0 : i32, i32
  }
  func.func @transform_8(%arg0: i32) -> (i32, i32) {
    %c0_i32 = arith.constant 0 : i32
    %c0_i32_0 = arith.constant 0 : i32
    return %arg0, %c0_i32 : i32, i32
  }
  func.func @transform_9(%arg0: i32) -> (i32, i32) {
    %c0_i32 = arith.constant 0 : i32
    %c0_i32_0 = arith.constant 0 : i32
    return %arg0, %c0_i32 : i32, i32
  }
}

</mosaic_0001>

<llo_original>
// kernel: mlp_vae_forward.1
$region0: #{mlp_vae_forward.1}
  #allocation0 [shape = 'u32[]', space=smem, size = 0x4, offset = 0x4, fixed_abs, tag = 'smem constant byte address 0x4 - core index']
  #allocation1 [shape = 'u32[144,128]{1,0:T(1,128)}', space=vmem, size = 0x12000, scoped, tag = 'internal scratch']
  %s0 = inlined_call_operand.vmem [shape: f32[8,160], index: 0, kind: input, shape index: {}]
  %s1 = inlined_call_operand.vmem [shape: f32[8,32], index: 1, kind: input, shape index: {}]
  %s2 = inlined_call_operand.vmem [shape: f32[1,2176], index: 2, kind: input, shape index: {}]
  %s3 = inlined_call_operand.vmem [shape: bf16[160,32], index: 3, kind: input, shape index: {}]
  %s4 = inlined_call_operand.vmem [shape: bf16[32,64], index: 4, kind: input, shape index: {}]
  %s5 = inlined_call_operand.vmem [shape: bf16[32,32], index: 5, kind: input, shape index: {}]
  %s6 = inlined_call_operand.vmem [shape: bf16[32,160], index: 6, kind: input, shape index: {}]
  %s7 = inlined_call_operand.vmem [shape: bf16[128,256], index: 7, kind: input, shape index: {}]
  %s8 = inlined_call_operand.vmem [shape: bf16[8,256], index: 8, kind: output, shape index: {0}]
  %s9 = inlined_call_operand.vmem [shape: f32[8,128], index: 9, kind: output, shape index: {1}]
  %10 = xla_tuple %s8, %s9
  %s11 = sld [smem:[#allocation0]]
  $region50: #{mlp_vae_forward.1} parent=0
    _
  %s13 = ssub.s32 1, %s11
  %s14 = scalar_select 0, %s13, %s11
  // Predicated region
  $region2: #{mlp_vae_forward.1} parent=0 // pred_check
    _
  $region3: #{mlp_vae_forward.1} parent=0 // pred_check_branch
    %16 = sbr.rel (0) target = $region5
  $region4: #{mlp_vae_forward.1} parent=0 // pred_region
    _
  $region5: #{mlp_vae_forward.1} parent=0 // pred_fallthru
    _
  // Predicated region
  $region6: #{mlp_vae_forward.1} parent=0 // pred_check
    _
  $region7: #{mlp_vae_forward.1} parent=0 // pred_check_branch
    %18 = sbr.rel (0) target = $region9
  $region8: #{mlp_vae_forward.1} parent=0 // pred_region
    _
  $region9: #{mlp_vae_forward.1} parent=0 // pred_fallthru
    _
  // Predicated region
  $region10: #{mlp_vae_forward.1} parent=0 // pred_check
    _
  $region11: #{mlp_vae_forward.1} parent=0 // pred_check_branch
    %20 = sbr.rel (0) target = $region13
  $region12: #{mlp_vae_forward.1} parent=0 // pred_region
    _
  $region13: #{mlp_vae_forward.1} parent=0 // pred_fallthru
    _
  // Predicated region
  $region14: #{mlp_vae_forward.1} parent=0 // pred_check
    _
  $region15: #{mlp_vae_forward.1} parent=0 // pred_check_branch
    %22 = sbr.rel (0) target = $region17
  $region16: #{mlp_vae_forward.1} parent=0 // pred_region
    _
  $region17: #{mlp_vae_forward.1} parent=0 // pred_fallthru
    _
  // Predicated region
  $region18: #{mlp_vae_forward.1} parent=0 // pred_check
    _
  $region19: #{mlp_vae_forward.1} parent=0 // pred_check_branch
    %24 = sbr.rel (0) target = $region21
  $region20: #{mlp_vae_forward.1} parent=0 // pred_region
    _
  $region21: #{mlp_vae_forward.1} parent=0 // pred_fallthru
    _
  // Predicated region
  $region22: #{mlp_vae_forward.1} parent=0 // pred_check
    _
  $region23: #{mlp_vae_forward.1} parent=0 // pred_check_branch
    %26 = sbr.rel (0) target = $region25
  $region24: #{mlp_vae_forward.1} parent=0 // pred_region
    _
  $region25: #{mlp_vae_forward.1} parent=0 // pred_fallthru
    _
  // Predicated region
  $region26: #{mlp_vae_forward.1} parent=0 // pred_check
    _
  $region27: #{mlp_vae_forward.1} parent=0 // pred_check_branch
    %28 = sbr.rel (0) target = $region29
  $region28: #{mlp_vae_forward.1} parent=0 // pred_region
    _
  $region29: #{mlp_vae_forward.1} parent=0 // pred_fallthru
    _
  // Predicated region
  $region30: #{mlp_vae_forward.1} parent=0 // pred_check
    _
  $region31: #{mlp_vae_forward.1} parent=0 // pred_check_branch
    %30 = sbr.rel (0) target = $region33
  $region32: #{mlp_vae_forward.1} parent=0 // pred_region
    _
  $region33: #{mlp_vae_forward.1} parent=0 // pred_fallthru
    _
  %v32 = vld [vmem:[%s0] sm:$0xff]
  %v33 = vld [vmem:[%s0 + $0x8] sm:$0xff]
  %v34 = vld [vmem:[%s2] sm:$0x3]
  %v35 = vld [vmem:[%s2 + $0x2] sm:$0x3]
  %vm36 = vcmask 261120
  %v37 = vsel %vm36, %v33, 0.0
  %v38 = vadd.f32 %v32, %v37
  %39 = vadd.xlane.f32.xlu0 %v38
  %v40 = vpop.xlane.xlu0 %39
  %v41 = vrcp.pop 160.0
  %v42 = vmul.f32 %v40, %v41
  %v43 = vmul.f32 %v32, %v32
  %v44 = vmul.f32 %v33, %v33
  %v45 = vsel %vm36, %v44, 0.0
  %v46 = vadd.f32 %v43, %v45
  %47 = vadd.xlane.f32.xlu0 %v46
  %v48 = vpop.xlane.xlu0 %47
  %v49 = vmul.f32 %v48, %v41
  %v50 = vmul.f32 %v42, %v42
  %v51 = vsub.f32 %v49, %v50
  %v52 = vmax.f32 %v51, 0.0
  %v53 = vsub.f32 %v32, %v42
  %v54 = vsub.f32 %v33, %v42
  %v55 = vadd.f32 %v52, 1e-05
  %v56 = vrsqrt.pop %v55
  %v57 = vmul.f32 %v53, %v56
  %v58 = vmul.f32 %v54, %v56
  %v60 = vlaneseq
  %v61 = vshrl.u32 %v60, 7
  %v62 = vsub.s32 0, %v61
  %v63 = vrot.slane %v34, %v62
  %v64 = vlaneseq
  %v65 = vshrl.u32 %v64, 7
  %v66 = vsub.s32 1, %v65
  %v67 = vrot.slane %v34, %v66
  %v70 = vmul.f32 %v57, %v63
  %v71 = vmul.f32 %v58, %v67
  %v73 = vlaneseq
  %v74 = vshrl.u32 %v73, 7
  %v75 = vsub.s32 0, %v74
  %v76 = vrot.slane %v35, %v75
  %v77 = vlaneseq
  %v78 = vshrl.u32 %v77, 7
  %v79 = vsub.s32 1, %v78
  %v80 = vrot.slane %v35, %v79
  %v83 = vadd.f32 %v70, %v76
  %v84 = vadd.f32 %v71, %v80
  %v85 = vld [vmem:[%s3] sm:$0xf]
  %v86 = vld [vmem:[%s3 + $0x4] sm:$0xf]
  %v87 = vld [vmem:[%s3 + $0x8] sm:$0xf]
  %v88 = vld [vmem:[%s3 + $0xc] sm:$0xf]
  %v89 = vld [vmem:[%s3 + $0x10] sm:$0xf]
  %v90 = vld [vmem:[%s3 + $0x14] sm:$0xf]
  %v91 = vld [vmem:[%s3 + $0x18] sm:$0xf]
  %v92 = vld [vmem:[%s3 + $0x1c] sm:$0xf]
  %v93 = vld [vmem:[%s3 + $0x20] sm:$0xf]
  %v94 = vld [vmem:[%s3 + $0x24] sm:$0xf]
  %v95 = vld [vmem:[%s3 + $0x28] sm:$0xf]
  %v96 = vld [vmem:[%s3 + $0x2c] sm:$0xf]
  %v97 = vld [vmem:[%s3 + $0x30] sm:$0xf]
  %v98 = vld [vmem:[%s3 + $0x34] sm:$0xf]
  %v99 = vld [vmem:[%s3 + $0x38] sm:$0xf]
  %v100 = vld [vmem:[%s3 + $0x3c] sm:$0xf]
  %v101 = vld [vmem:[%s3 + $0x40] sm:$0xf]
  %v102 = vld [vmem:[%s3 + $0x44] sm:$0xf]
  %v103 = vld [vmem:[%s3 + $0x48] sm:$0xf]
  %v104 = vld [vmem:[%s3 + $0x4c] sm:$0xf]
  %v105 = vpack.c.bf16 %v83, %v83
  %v106 = vpack.c.bf16 %v84, %v84
  %v107 = vld [vmem:[%s2 + $0x4] sm:$0x1]
  %v109 = vlaneseq
  %v110 = vshrl.u32 %v109, 7
  %v111 = vsub.s32 0, %v110
  %v112 = vrot.slane %v107, %v111
  %v134 = vunpack.c.l.b16 %v85
  %v135 = vunpack.c.l.b16 %v86
  %v136 = vunpack.c.l.b16 %v87
  %v137 = vunpack.c.l.b16 %v88
  %v138 = vunpack.c.l.b16 %v89
  %v139 = vunpack.c.l.b16 %v90
  %v140 = vunpack.c.l.b16 %v91
  %v141 = vunpack.c.l.b16 %v92
  %v142 = vunpack.c.l.b16 %v93
  %v143 = vunpack.c.l.b16 %v94
  %v144 = vunpack.c.l.b16 %v95
  %v145 = vunpack.c.l.b16 %v96
  %v146 = vunpack.c.l.b16 %v97
  %v147 = vunpack.c.l.b16 %v98
  %v148 = vunpack.c.l.b16 %v99
  %v149 = vunpack.c.l.b16 %v100
  %v150 = vunpack.c.l.b16 %v101
  %v151 = vunpack.c.l.b16 %v102
  %v152 = vunpack.c.l.b16 %v103
  %v153 = vunpack.c.l.b16 %v104
  %v154 = vpack.c.b16 %v135, %v134
  %v155 = vpack.c.b16 %v137, %v136
  %v156 = vpack.c.b16 %v139, %v138
  %v157 = vpack.c.b16 %v141, %v140
  %v158 = vpack.c.b16 %v143, %v142
  %v159 = vpack.c.b16 %v145, %v144
  %v160 = vpack.c.b16 %v147, %v146
  %v161 = vpack.c.b16 %v149, %v148
  %v162 = vpack.c.b16 %v151, %v150
  %v163 = vpack.c.b16 %v153, %v152
  %v175 = vsel %vm36, %v106, 0
  %177 = vmatprep.subr.bf16.mxu0 0
  %178 = vmatpush1.bf16.msra.mxu0 %v154
  %179 = vmatprep.subr.bf16.mxu0 0
  %180 = vmatpush1.bf16.msra.mxu0 %v155
  %181 = vmatprep.subr.bf16.mxu0 0
  %182 = vmatpush1.bf16.msra.mxu0 %v156
  %183 = vmatprep.subr.bf16.mxu0 0
  %184 = vmatpush1.bf16.msra.mxu0 %v157
  %185 = vmatprep.subr.bf16.mxu0 0
  %186 = vmatpush1.bf16.msra.mxu0 %v158
  %187 = vmatprep.subr.bf16.mxu0 0
  %188 = vmatpush1.bf16.msra.mxu0 %v159
  %189 = vmatprep.subr.bf16.mxu0 0
  %190 = vmatpush1.bf16.msra.mxu0 %v160
  %191 = vmatprep.subr.bf16.mxu0 0
  %192 = vmatpush1.bf16.msra.mxu0 %v161
  %193 = vmatprep.subr.bf16.mxu0 0
  %194 = vmatpush1.bf16.msra.mxu0 %v162
  %195 = vmatprep.subr.bf16.mxu0 0
  %196 = vmatpush1.bf16.msra.mxu0 %v163
  %197 = vmatprep.subr.bf16.mxu0 0
  %198 = vmatpush1.bf16.msra.mxu0 0
  %199 = vmatprep.subr.bf16.mxu0 0
  %200 = vmatpush1.bf16.msra.mxu0 0
  %201 = vmatprep.subr.bf16.mxu0 0
  %202 = vmatpush1.bf16.msra.mxu0 0
  %203 = vmatprep.subr.bf16.mxu0 0
  %204 = vmatpush1.bf16.msra.mxu0 0
  %205 = vmatprep.subr.bf16.mxu0 0
  %206 = vmatpush1.bf16.msra.mxu0 0
  %207 = vmatprep.subr.bf16.mxu0 0
  %208 = vmatpush1.bf16.msra.mxu0 0
  %209 = vmatprep.mubr.bf16.mxu0 %v175
  %210 = vmatmul.mubr.bf16.gmra.mrb[0].mxu0 %v105
  %v211 = vpop.f32.mrb[0].mxu0
  %v212 = vadd.f32 %v112, %v211
  %v213 = vpop.f32.mrb[0].mxu0
  %v214 = vpop.f32.mrb[0].mxu0
  %v215 = vpop.f32.mrb[0].mxu0
  %216 = vdwg.mxu0
  %v217 = vmax.f32 %v212, 0.0
  %v218 = vld [vmem:[%s2 + $0x5] sm:$0x1]
  %v219 = vld [vmem:[%s2 + $0x6] sm:$0x1]
  %v220 = vsel %vm36, %v217, 0.0
  %221 = vadd.xlane.f32.xlu0 %v220
  %v222 = vpop.xlane.xlu0 %221
  %v223 = vrcp.pop 32.0
  %v224 = vmul.f32 %v222, %v223
  %v225 = vmul.f32 %v217, %v217
  %v226 = vsel %vm36, %v225, 0.0
  %227 = vadd.xlane.f32.xlu0 %v226
  %v228 = vpop.xlane.xlu0 %227
  %v229 = vmul.f32 %v228, %v223
  %v230 = vmul.f32 %v224, %v224
  %v231 = vsub.f32 %v229, %v230
  %v232 = vmax.f32 %v231, 0.0
  %v233 = vsub.f32 %v217, %v224
  %v234 = vadd.f32 %v232, 1e-05
  %v235 = vrsqrt.pop %v234
  %v236 = vmul.f32 %v233, %v235
  %v238 = vlaneseq
  %v239 = vshrl.u32 %v238, 7
  %v240 = vsub.s32 0, %v239
  %v241 = vrot.slane %v218, %v240
  %v243 = vmul.f32 %v236, %v241
  %v245 = vlaneseq
  %v246 = vshrl.u32 %v245, 7
  %v247 = vsub.s32 0, %v246
  %v248 = vrot.slane %v219, %v247
  %v250 = vadd.f32 %v243, %v248
  %v251 = vld [vmem:[%s4] sm:$0xf]
  %v252 = vld [vmem:[%s4 + $0x4] sm:$0xf]
  %v253 = vld [vmem:[%s4 + $0x8] sm:$0xf]
  %v254 = vld [vmem:[%s4 + $0xc] sm:$0xf]
  %v255 = vpack.c.bf16 %v250, %v250
  %v256 = vld [vmem:[%s2 + $0x7] sm:$0x1]
  %v258 = vlaneseq
  %v259 = vshrl.u32 %v258, 7
  %v260 = vsub.s32 0, %v259
  %v261 = vrot.slane %v256, %v260
  %v267 = vunpack.c.l.b16 %v251
  %v268 = vunpack.c.l.b16 %v252
  %v269 = vunpack.c.l.b16 %v253
  %v270 = vunpack.c.l.b16 %v254
  %v271 = vpack.c.b16 %v268, %v267
  %v272 = vpack.c.b16 %v270, %v269
  %v276 = vsel %vm36, %v255, 0
  %278 = vmatprep.subr.bf16.mxu0 0
  %279 = vmatpush1.bf16.msra.mxu0 %v271
  %280 = vmatprep.subr.bf16.mxu0 0
  %281 = vmatpush1.bf16.msra.mxu0 %v272
  %282 = vmatprep.subr.bf16.mxu0 0
  %283 = vmatpush1.bf16.msra.mxu0 0
  %284 = vmatprep.subr.bf16.mxu0 0
  %285 = vmatpush1.bf16.msra.mxu0 0
  %286 = vmatprep.subr.bf16.mxu0 0
  %287 = vmatpush1.bf16.msra.mxu0 0
  %288 = vmatprep.subr.bf16.mxu0 0
  %289 = vmatpush1.bf16.msra.mxu0 0
  %290 = vmatprep.subr.bf16.mxu0 0
  %291 = vmatpush1.bf16.msra.mxu0 0
  %292 = vmatprep.subr.bf16.mxu0 0
  %293 = vmatpush1.bf16.msra.mxu0 0
  %294 = vmatprep.subr.bf16.mxu0 0
  %295 = vmatpush1.bf16.msra.mxu0 0
  %296 = vmatprep.subr.bf16.mxu0 0
  %297 = vmatpush1.bf16.msra.mxu0 0
  %298 = vmatprep.subr.bf16.mxu0 0
  %299 = vmatpush1.bf16.msra.mxu0 0
  %300 = vmatprep.subr.bf16.mxu0 0
  %301 = vmatpush1.bf16.msra.mxu0 0
  %302 = vmatprep.subr.bf16.mxu0 0
  %303 = vmatpush1.bf16.msra.mxu0 0
  %304 = vmatprep.subr.bf16.mxu0 0
  %305 = vmatpush1.bf16.msra.mxu0 0
  %306 = vmatprep.subr.bf16.mxu0 0
  %307 = vmatpush1.bf16.msra.mxu0 0
  %308 = vmatprep.subr.bf16.mxu0 0
  %309 = vmatpush1.bf16.msra.mxu0 0
  %310 = vmatprep.mubr.bf16.mxu0 0
  %311 = vmatmul.mubr.bf16.gmra.mrb[0].mxu0 %v276
  %v312 = vpop.f32.mrb[0].mxu0
  %v313 = vadd.f32 %v261, %v312
  %v314 = vpop.f32.mrb[0].mxu0
  %v315 = vpop.f32.mrb[0].mxu0
  %v316 = vpop.f32.mrb[0].mxu0
  %317 = vdwg.mxu0
  %v318 = vmul.f32 %v313, 1.442695
  %v319 = vpow.pop %v318
  %v320 = vld [vmem:[%s1] sm:$0xff]
  %322 = vrot.lane.b32.xlu0 %v320, 32
  %v323 = vpop.permute.xlu0 %322
  %v325 = vmul.f32 %v319, %v323
  %327 = vrot.lane.b32.xlu0 %v325, 96
  %v328 = vpop.permute.xlu0 %327
  %v330 = vadd.f32 %v313, %v328
  %332 = vrot.lane.b32.xlu0 %v313, 32
  %v333 = vpop.permute.xlu0 %332
  %v335 = vsel %vm36, %v330, %v333
  %vm336 = vcmask 785408
  %v337 = vsel %vm336, %v335, 0.0
  %338 = vst [vmem:[%s9] sm:$0xff] %v337
  %v339 = vld [vmem:[%s2 + $0x8] sm:$0x1]
  %v340 = vld [vmem:[%s2 + $0x9] sm:$0x1]
  %v341 = vsel %vm36, %v330, 0.0
  %342 = vadd.xlane.f32.xlu0 %v341
  %v343 = vpop.xlane.xlu0 %342
  %v344 = vmul.f32 %v343, %v223
  %v345 = vmul.f32 %v330, %v330
  %v346 = vsel %vm36, %v345, 0.0
  %347 = vadd.xlane.f32.xlu0 %v346
  %v348 = vpop.xlane.xlu0 %347
  %v349 = vmul.f32 %v348, %v223
  %v350 = vmul.f32 %v344, %v344
  %v351 = vsub.f32 %v349, %v350
  %v352 = vmax.f32 %v351, 0.0
  %v353 = vsub.f32 %v330, %v344
  %v354 = vadd.f32 %v352, 1e-05
  %v355 = vrsqrt.pop %v354
  %v356 = vmul.f32 %v353, %v355
  %v358 = vlaneseq
  %v359 = vshrl.u32 %v358, 7
  %v360 = vsub.s32 0, %v359
  %v361 = vrot.slane %v339, %v360
  %v363 = vmul.f32 %v356, %v361
  %v365 = vlaneseq
  %v366 = vshrl.u32 %v365, 7
  %v367 = vsub.s32 0, %v366
  %v368 = vrot.slane %v340, %v367
  %v370 = vadd.f32 %v363, %v368
  %v371 = vld [vmem:[%s5] sm:$0xf]
  %v372 = vld [vmem:[%s5 + $0x4] sm:$0xf]
  %v373 = vld [vmem:[%s5 + $0x8] sm:$0xf]
  %v374 = vld [vmem:[%s5 + $0xc] sm:$0xf]
  %v375 = vpack.c.bf16 %v370, %v370
  %v376 = vld [vmem:[%s2 + $0xa] sm:$0x1]
  %v378 = vlaneseq
  %v379 = vshrl.u32 %v378, 7
  %v380 = vsub.s32 0, %v379
  %v381 = vrot.slane %v376, %v380
  %v387 = vunpack.c.l.b16 %v371
  %v388 = vunpack.c.l.b16 %v372
  %v389 = vunpack.c.l.b16 %v373
  %v390 = vunpack.c.l.b16 %v374
  %v391 = vpack.c.b16 %v388, %v387
  %v392 = vpack.c.b16 %v390, %v389
  %v396 = vsel %vm36, %v375, 0
  %398 = vmatprep.subr.bf16.mxu0 0
  %399 = vmatpush1.bf16.msra.mxu0 %v391
  %400 = vmatprep.subr.bf16.mxu0 0
  %401 = vmatpush1.bf16.msra.mxu0 %v392
  %402 = vmatprep.subr.bf16.mxu0 0
  %403 = vmatpush1.bf16.msra.mxu0 0
  %404 = vmatprep.subr.bf16.mxu0 0
  %405 = vmatpush1.bf16.msra.mxu0 0
  %406 = vmatprep.subr.bf16.mxu0 0
  %407 = vmatpush1.bf16.msra.mxu0 0
  %408 = vmatprep.subr.bf16.mxu0 0
  %409 = vmatpush1.bf16.msra.mxu0 0
  %410 = vmatprep.subr.bf16.mxu0 0
  %411 = vmatpush1.bf16.msra.mxu0 0
  %412 = vmatprep.subr.bf16.mxu0 0
  %413 = vmatpush1.bf16.msra.mxu0 0
  %414 = vmatprep.subr.bf16.mxu0 0
  %415 = vmatpush1.bf16.msra.mxu0 0
  %416 = vmatprep.subr.bf16.mxu0 0
  %417 = vmatpush1.bf16.msra.mxu0 0
  %418 = vmatprep.subr.bf16.mxu0 0
  %419 = vmatpush1.bf16.msra.mxu0 0
  %420 = vmatprep.subr.bf16.mxu0 0
  %421 = vmatpush1.bf16.msra.mxu0 0
  %422 = vmatprep.subr.bf16.mxu0 0
  %423 = vmatpush1.bf16.msra.mxu0 0
  %424 = vmatprep.subr.bf16.mxu0 0
  %425 = vmatpush1.bf16.msra.mxu0 0
  %426 = vmatprep.subr.bf16.mxu0 0
  %427 = vmatpush1.bf16.msra.mxu0 0
  %428 = vmatprep.subr.bf16.mxu0 0
  %429 = vmatpush1.bf16.msra.mxu0 0
  %430 = vmatprep.mubr.bf16.mxu0 0
  %431 = vmatmul.mubr.bf16.gmra.mrb[0].mxu0 %v396
  %v432 = vpop.f32.mrb[0].mxu0
  %v433 = vadd.f32 %v381, %v432
  %v434 = vpop.f32.mrb[0].mxu0
  %v435 = vpop.f32.mrb[0].mxu0
  %v436 = vpop.f32.mrb[0].mxu0
  %437 = vdwg.mxu0
  %v438 = vmax.f32 %v433, 0.0
  %v439 = vld [vmem:[%s2 + $0xb] sm:$0x1]
  %v440 = vld [vmem:[%s2 + $0xc] sm:$0x1]
  %v441 = vsel %vm36, %v438, 0.0
  %442 = vadd.xlane.f32.xlu0 %v441
  %v443 = vpop.xlane.xlu0 %442
  %v444 = vmul.f32 %v443, %v223
  %v445 = vmul.f32 %v438, %v438
  %v446 = vsel %vm36, %v445, 0.0
  %447 = vadd.xlane.f32.xlu0 %v446
  %v448 = vpop.xlane.xlu0 %447
  %v449 = vmul.f32 %v448, %v223
  %v450 = vmul.f32 %v444, %v444
  %v451 = vsub.f32 %v449, %v450
  %v452 = vmax.f32 %v451, 0.0
  %v453 = vsub.f32 %v438, %v444
  %v454 = vadd.f32 %v452, 1e-05
  %v455 = vrsqrt.pop %v454
  %v456 = vmul.f32 %v453, %v455
  %v458 = vlaneseq
  %v459 = vshrl.u32 %v458, 7
  %v460 = vsub.s32 0, %v459
  %v461 = vrot.slane %v439, %v460
  %v463 = vmul.f32 %v456, %v461
  %v465 = vlaneseq
  %v466 = vshrl.u32 %v465, 7
  %v467 = vsub.s32 0, %v466
  %v468 = vrot.slane %v440, %v467
  %v470 = vadd.f32 %v463, %v468
  %v471 = vld [vmem:[%s6] sm:$0xff]
  %v472 = vld [vmem:[%s6 + $0x8] sm:$0xff]
  %v473 = vld [vmem:[%s6 + $0x10] sm:$0xff]
  %v474 = vld [vmem:[%s6 + $0x18] sm:$0xff]
  %v475 = vpack.c.bf16 %v470, %v470
  %v476 = vld [vmem:[%s2 + $0xd] sm:$0x3]
  %v478 = vlaneseq
  %v479 = vshrl.u32 %v478, 7
  %v480 = vsub.s32 0, %v479
  %v481 = vrot.slane %v476, %v480
  %v482 = vlaneseq
  %v483 = vshrl.u32 %v482, 7
  %v484 = vsub.s32 1, %v483
  %v485 = vrot.slane %v476, %v484
  %v492 = vunpack.c.l.b16 %v471
  %v493 = vunpack.c.h.b16 %v471
  %v494 = vunpack.c.l.b16 %v472
  %v495 = vunpack.c.h.b16 %v472
  %v496 = vunpack.c.l.b16 %v473
  %v497 = vunpack.c.h.b16 %v473
  %v498 = vunpack.c.l.b16 %v474
  %v499 = vunpack.c.h.b16 %v474
  %v500 = vpack.c.b16 %v494, %v492
  %v501 = vpack.c.b16 %v495, %v493
  %v502 = vpack.c.b16 %v498, %v496
  %v503 = vpack.c.b16 %v499, %v497
  %v509 = vsel %vm36, %v475, 0
  %511 = vmatprep.subr.bf16.mxu0 %v501
  %512 = vmatpush1.bf16.msra.mxu0 %v500
  %513 = vmatprep.subr.bf16.mxu0 %v503
  %514 = vmatpush1.bf16.msra.mxu0 %v502
  %515 = vmatprep.subr.bf16.mxu0 0
  %516 = vmatpush1.bf16.msra.mxu0 0
  %517 = vmatprep.subr.bf16.mxu0 0
  %518 = vmatpush1.bf16.msra.mxu0 0
  %519 = vmatprep.subr.bf16.mxu0 0
  %520 = vmatpush1.bf16.msra.mxu0 0
  %521 = vmatprep.subr.bf16.mxu0 0
  %522 = vmatpush1.bf16.msra.mxu0 0
  %523 = vmatprep.subr.bf16.mxu0 0
  %524 = vmatpush1.bf16.msra.mxu0 0
  %525 = vmatprep.subr.bf16.mxu0 0
  %526 = vmatpush1.bf16.msra.mxu0 0
  %527 = vmatprep.subr.bf16.mxu0 0
  %528 = vmatpush1.bf16.msra.mxu0 0
  %529 = vmatprep.subr.bf16.mxu0 0
  %530 = vmatpush1.bf16.msra.mxu0 0
  %531 = vmatprep.subr.bf16.mxu0 0
  %532 = vmatpush1.bf16.msra.mxu0 0
  %533 = vmatprep.subr.bf16.mxu0 0
  %534 = vmatpush1.bf16.msra.mxu0 0
  %535 = vmatprep.subr.bf16.mxu0 0
  %536 = vmatpush1.bf16.msra.mxu0 0
  %537 = vmatprep.subr.bf16.mxu0 0
  %538 = vmatpush1.bf16.msra.mxu0 0
  %539 = vmatprep.subr.bf16.mxu0 0
  %540 = vmatpush1.bf16.msra.mxu0 0
  %541 = vmatprep.subr.bf16.mxu0 0
  %542 = vmatpush1.bf16.msra.mxu0 0
  %543 = vmatprep.mubr.bf16.mxu0 0
  %544 = vmatmul.mubr.bf16.gmra.mrb[0].mxu0 %v509
  %v545 = vpop.f32.mrb[0].mxu0
  %v546 = vadd.f32 %v481, %v545
  %v547 = vpop.f32.mrb[0].mxu0
  %v548 = vadd.f32 %v485, %v547
  %v549 = vpop.f32.mrb[0].mxu0
  %v550 = vpop.f32.mrb[0].mxu0
  %551 = vdwg.mxu0
  %v552 = vld [vmem:[%s7] sm:$0xff]
  %v553 = vld [vmem:[%s7 + $0x8] sm:$0xff]
  %v554 = vld [vmem:[%s7 + $0x10] sm:$0xff]
  %v555 = vld [vmem:[%s7 + $0x18] sm:$0xff]
  %v556 = vld [vmem:[%s7 + $0x20] sm:$0xff]
  %v557 = vld [vmem:[%s7 + $0x28] sm:$0xff]
  %v558 = vld [vmem:[%s7 + $0x30] sm:$0xff]
  %v559 = vld [vmem:[%s7 + $0x38] sm:$0xff]
  %v560 = vld [vmem:[%s7 + $0x40] sm:$0xff]
  %v561 = vld [vmem:[%s7 + $0x48] sm:$0xff]
  %v562 = vld [vmem:[%s7 + $0x50] sm:$0xff]
  %v563 = vld [vmem:[%s7 + $0x58] sm:$0xff]
  %v564 = vld [vmem:[%s7 + $0x60] sm:$0xff]
  %v565 = vld [vmem:[%s7 + $0x68] sm:$0xff]
  %v566 = vld [vmem:[%s7 + $0x70] sm:$0xff]
  %v567 = vld [vmem:[%s7 + $0x78] sm:$0xff]
  %v568 = vpack.c.bf16 %v546, %v546
  %v585 = vunpack.c.l.b16 %v552
  %v586 = vunpack.c.l.b16 %v553
  %v587 = vunpack.c.l.b16 %v554
  %v588 = vunpack.c.l.b16 %v555
  %v589 = vunpack.c.l.b16 %v556
  %v590 = vunpack.c.l.b16 %v557
  %v591 = vunpack.c.l.b16 %v558
  %v592 = vunpack.c.l.b16 %v559
  %v593 = vunpack.c.l.b16 %v560
  %v594 = vunpack.c.l.b16 %v561
  %v595 = vunpack.c.l.b16 %v562
  %v596 = vunpack.c.l.b16 %v563
  %v597 = vunpack.c.l.b16 %v564
  %v598 = vunpack.c.l.b16 %v565
  %v599 = vunpack.c.l.b16 %v566
  %v600 = vunpack.c.l.b16 %v567
  %v601 = vpack.c.b16 %v586, %v585
  %v602 = vpack.c.b16 %v588, %v587
  %v603 = vpack.c.b16 %v590, %v589
  %v604 = vpack.c.b16 %v592, %v591
  %v605 = vpack.c.b16 %v594, %v593
  %v606 = vpack.c.b16 %v596, %v595
  %v607 = vpack.c.b16 %v598, %v597
  %v608 = vpack.c.b16 %v600, %v599
  %617 = vmatprep.subr.bf16.mxu0 0
  %618 = vmatpush1.bf16.msra.mxu0 %v601
  %619 = vmatprep.subr.bf16.mxu0 0
  %620 = vmatpush1.bf16.msra.mxu0 %v602
  %621 = vmatprep.subr.bf16.mxu0 0
  %622 = vmatpush1.bf16.msra.mxu0 %v603
  %623 = vmatprep.subr.bf16.mxu0 0
  %624 = vmatpush1.bf16.msra.mxu0 %v604
  %625 = vmatprep.subr.bf16.mxu0 0
  %626 = vmatpush1.bf16.msra.mxu0 %v605
  %627 = vmatprep.subr.bf16.mxu0 0
  %628 = vmatpush1.bf16.msra.mxu0 %v606
  %629 = vmatprep.subr.bf16.mxu0 0
  %630 = vmatpush1.bf16.msra.mxu0 %v607
  %631 = vmatprep.subr.bf16.mxu0 0
  %632 = vmatpush1.bf16.msra.mxu0 %v608
  %633 = vmatprep.subr.bf16.mxu0 0
  %634 = vmatpush1.bf16.msra.mxu0 0
  %635 = vmatprep.subr.bf16.mxu0 0
  %636 = vmatpush1.bf16.msra.mxu0 0
  %637 = vmatprep.subr.bf16.mxu0 0
  %638 = vmatpush1.bf16.msra.mxu0 0
  %639 = vmatprep.subr.bf16.mxu0 0
  %640 = vmatpush1.bf16.msra.mxu0 0
  %641 = vmatprep.subr.bf16.mxu0 0
  %642 = vmatpush1.bf16.msra.mxu0 0
  %643 = vmatprep.subr.bf16.mxu0 0
  %644 = vmatpush1.bf16.msra.mxu0 0
  %645 = vmatprep.subr.bf16.mxu0 0
  %646 = vmatpush1.bf16.msra.mxu0 0
  %647 = vmatprep.subr.bf16.mxu0 0
  %648 = vmatpush1.bf16.msra.mxu0 0
  %649 = vmatprep.mubr.bf16.mxu0 0
  %650 = vmatmul.mubr.bf16.gmra.mrb[0].mxu0 %v568
  %v651 = vpop.f32.mrb[0].mxu0
  %v652 = vadd.f32 0.0, %v651
  %v653 = vpop.f32.mrb[0].mxu0
  %v654 = vpop.f32.mrb[0].mxu0
  %v655 = vpop.f32.mrb[0].mxu0
  %656 = vdwg.mxu0
  %v657 = vpack.c.bf16 %v548, %v548
  %v658 = vunpack.c.h.b16 %v552
  %v659 = vunpack.c.h.b16 %v553
  %v660 = vunpack.c.h.b16 %v554
  %v661 = vunpack.c.h.b16 %v555
  %v662 = vpack.c.b16 %v659, %v658
  %v663 = vpack.c.b16 %v661, %v660
  %v667 = vsel %vm36, %v657, 0
  %669 = vmatprep.subr.bf16.mxu0 0
  %670 = vmatpush1.bf16.msra.mxu0 %v662
  %671 = vmatprep.subr.bf16.mxu0 0
  %672 = vmatpush1.bf16.msra.mxu0 %v663
  %673 = vmatprep.subr.bf16.mxu0 0
  %674 = vmatpush1.bf16.msra.mxu0 0
  %675 = vmatprep.subr.bf16.mxu0 0
  %676 = vmatpush1.bf16.msra.mxu0 0
  %677 = vmatprep.subr.bf16.mxu0 0
  %678 = vmatpush1.bf16.msra.mxu0 0
  %679 = vmatprep.subr.bf16.mxu0 0
  %680 = vmatpush1.bf16.msra.mxu0 0
  %681 = vmatprep.subr.bf16.mxu0 0
  %682 = vmatpush1.bf16.msra.mxu0 0
  %683 = vmatprep.subr.bf16.mxu0 0
  %684 = vmatpush1.bf16.msra.mxu0 0
  %685 = vmatprep.subr.bf16.mxu0 0
  %686 = vmatpush1.bf16.msra.mxu0 0
  %687 = vmatprep.subr.bf16.mxu0 0
  %688 = vmatpush1.bf16.msra.mxu0 0
  %689 = vmatprep.subr.bf16.mxu0 0
  %690 = vmatpush1.bf16.msra.mxu0 0
  %691 = vmatprep.subr.bf16.mxu0 0
  %692 = vmatpush1.bf16.msra.mxu0 0
  %693 = vmatprep.subr.bf16.mxu0 0
  %694 = vmatpush1.bf16.msra.mxu0 0
  %695 = vmatprep.subr.bf16.mxu0 0
  %696 = vmatpush1.bf16.msra.mxu0 0
  %697 = vmatprep.subr.bf16.mxu0 0
  %698 = vmatpush1.bf16.msra.mxu0 0
  %699 = vmatprep.subr.bf16.mxu0 0
  %700 = vmatpush1.bf16.msra.mxu0 0
  %701 = vmatprep.mubr.bf16.mxu0 0
  %702 = vmatmul.mubr.bf16.gmra.mrb[0].mxu0 %v667
  %v703 = vpop.f32.mrb[0].mxu0
  %v704 = vadd.f32 0.0, %v703
  %v705 = vpop.f32.mrb[0].mxu0
  %v706 = vpop.f32.mrb[0].mxu0
  %v707 = vpop.f32.mrb[0].mxu0
  %708 = vdwg.mxu0
  %v709 = vld [vmem:[%s2 + $0xf] sm:$0x3]
  %v711 = vlaneseq
  %v712 = vshrl.u32 %v711, 7
  %v713 = vsub.s32 0, %v712
  %v714 = vrot.slane %v709, %v713
  %v715 = vlaneseq
  %v716 = vshrl.u32 %v715, 7
  %v717 = vsub.s32 1, %v716
  %v718 = vrot.slane %v709, %v717
  %v721 = vadd.f32 %v652, %v714
  %v722 = vadd.f32 %v704, %v718
  %v723 = vpack.c.bf16 %v721, %v721
  %v724 = vpack.c.bf16 %v722, %v722
  %v727 = vunpack.c.l.b16 %v723
  %v728 = vunpack.c.l.b16 %v724
  %v729 = vpack.c.b16 %v728, %v727
  %731 = vst [vmem:[%s8] sm:$0xff] %v729
  // Predicated region
  $region34: #{mlp_vae_forward.1} parent=0 // pred_check
    _
  $region35: #{mlp_vae_forward.1} parent=0 // pred_check_branch
    %733 = sbr.rel (0) target = $region37
  $region36: #{mlp_vae_forward.1} parent=0 // pred_region
    _
  $region37: #{mlp_vae_forward.1} parent=0 // pred_fallthru
    _
  // Predicated region
  $region38: #{mlp_vae_forward.1} parent=0 // pred_check
    _
  $region39: #{mlp_vae_forward.1} parent=0 // pred_check_branch
    %735 = sbr.rel (0) target = $region41
  $region40: #{mlp_vae_forward.1} parent=0 // pred_region
    _
  $region41: #{mlp_vae_forward.1} parent=0 // pred_fallthru
    _
  // Predicated region
  $region42: #{mlp_vae_forward.1} parent=0 // pred_check
    _
  $region43: #{mlp_vae_forward.1} parent=0 // pred_check_branch
    %737 = sbr.rel (0) target = $region45
  $region44: #{mlp_vae_forward.1} parent=0 // pred_region
    _
  $region45: #{mlp_vae_forward.1} parent=0 // pred_fallthru
    _
  // Predicated region
  $region46: #{mlp_vae_forward.1} parent=0 // pred_check
    _
  $region47: #{mlp_vae_forward.1} parent=0 // pred_check_branch
    %739 = sbr.rel (0) target = $region49
  $region48: #{mlp_vae_forward.1} parent=0 // pred_region
    _
  $region49: #{mlp_vae_forward.1} parent=0 // pred_fallthru
    _

</llo_original>
